<compile_context>
chip_gen: v7x
topology: tpu7x:2x2x1
jax: 0.10.0
libtpu: 0.0.40
codegen_flags: <defaults>
</compile_context>

<pallas_src>
import jax
import jax.numpy as jnp
from jax.experimental import pallas as pl
from jax.experimental.pallas import tpu as pltpu

EPS = 1e-5

_MAX_ROW_TILE = 2048          # big enough to amortize per-step overhead on 128-MiB parts
_TARGET_GRID_STEPS = 8        # keep both v7x TensorCores fed + steady-state pipelining
_DEFAULT_PHYS_VMEM = 64 * 1024 * 1024   # assume the smallest part (v7x) if query fails


def _olmo_layernorm_kernel(x_ref, o_ref):
    # Upcast to float32 for the whole normalization (matches
    # hidden_states.to(torch.float32) in the PyTorch forward).
    x = x_ref[...].astype(jnp.float32)
    inv_n = jnp.float32(1.0 / x.shape[-1])
    # Two independent row-wise reductions off the single upcast (shorter VALU
    # dependency chain than mean -> center -> square -> mean; neutral on
    # v5e/v6e where compute hides under HBM traffic, helps v7x).
    mean = jnp.sum(x, axis=-1, keepdims=True) * inv_n
    mean_sq = jnp.sum(x * x, axis=-1, keepdims=True) * inv_n
    # var = E[x^2] - mean^2 in fp32; clamp at 0 to guard against floating-point
    # cancellation for inputs with |mean| >> std.
    var = jnp.maximum(mean_sq - mean * mean, 0.0)
    scale = jax.lax.rsqrt(var + EPS)
    # Normalize and cast back to the original dtype, fused into the store
    # (matches .to(orig_dtype)).
    o_ref[...] = ((x - mean) * scale).astype(o_ref.dtype)


def _round_up(x: int, m: int) -> int:
    return ((x + m - 1) // m) * m


def _vmem_caps() -> tuple[int, int]:
    """Return (tile-picker budget bytes, vmem_limit_bytes) for this TPU generation."""
    try:
        phys = int(pltpu.get_tpu_info().vmem_capacity_bytes)
        if phys <= 0:
            phys = _DEFAULT_PHYS_VMEM
    except Exception:  # query unavailable; assume the smallest (v7x-sized) VMEM
        phys = _DEFAULT_PHYS_VMEM
    # Scoped limit ~75% of physical VMEM: ~48 MiB on v7x, ~96 MiB on v5e/v6e,
    # leaving headroom for Mosaic internal scratch.
    limit = (phys * 3) // 4
    # Budget for the double-buffered I/O blocks plus in-body fp32 temporaries.
    budget = max(limit - 16 * 1024 * 1024, limit // 2)
    return budget, limit


def _pick_row_tile(rows: int, hidden: int, dtype, budget_bytes: int) -> int:
    """Choose a large, sublane-aligned row tile that fits the VMEM budget."""
    itemsize = jnp.dtype(dtype).itemsize
    # Sublane packing: 8 rows/vreg for 4-byte dtypes, 16 for bf16, 32 for 1-byte.
    sublane = max(8, 32 // itemsize)
    # Per-row VMEM cost: double-buffered input + output blocks (4 * itemsize)
    # plus fp32 temporaries materialized in the kernel body (upcast / x*x /
    # scaled output). For fp32 inputs the upcast is effectively a no-op, so
    # fewer temp bytes are needed.
    temp_bytes = 16 if itemsize < 4 else 12
    bytes_per_row = hidden * (4 * itemsize + temp_bytes)
    tile = max(sublane, budget_bytes // bytes_per_row)
    tile = min(tile, _MAX_ROW_TILE)
    # Target >= _TARGET_GRID_STEPS roughly even grid steps whenever there is
    # enough work: shards the single parallel grid axis across both v7x
    # TensorCores and lets the double-buffer pipeline reach steady state.
    tile = min(tile, max(sublane, _round_up(pl.cdiv(rows, _TARGET_GRID_STEPS), sublane)))
    # Round down to the sublane packing so I/O vregs are fully packed.
    tile = max(sublane, (tile // sublane) * sublane)
    return tile


def olmo_layer_norm(hidden_states: jax.Array, *, row_tile: int | None = None) -> jax.Array:
    """LayerNorm over the last axis, no weight/bias, eps=1e-5, fp32 compute.

    Note: for peak performance `hidden` should be a multiple of 128 (true for
    real OLMo configs, e.g. 2048/4096); narrower hidden sizes still run
    correctly (the block spans the full lane extent) but hit masked lane stores.
    """
    orig_shape = hidden_states.shape
    hidden = orig_shape[-1]
    x2d = hidden_states.reshape(-1, hidden)
    rows = x2d.shape[0]

    budget_bytes, vmem_limit_bytes = _vmem_caps()
    tile = row_tile if row_tile is not None else _pick_row_tile(
        rows, hidden, hidden_states.dtype, budget_bytes
    )

    out = pl.pallas_call(
        _olmo_layernorm_kernel,
        out_shape=jax.ShapeDtypeStruct((rows, hidden), hidden_states.dtype),
        grid=(pl.cdiv(rows, tile),),  # ragged last block handled by Pallas
        in_specs=[pl.BlockSpec((tile, hidden), lambda i: (i, 0))],
        out_specs=pl.BlockSpec((tile, hidden), lambda i: (i, 0)),
        compiler_params=pltpu.CompilerParams(
            dimension_semantics=("parallel",),
            vmem_limit_bytes=vmem_limit_bytes,
        ),
    )(x2d)
    return out.reshape(orig_shape)


def _reference_olmo_layer_norm(hidden_states: jax.Array) -> jax.Array:
    orig_dtype = hidden_states.dtype
    x = hidden_states.astype(jnp.float32)
    mean = jnp.mean(x, axis=-1, keepdims=True)
    var = jnp.mean(jnp.square(x - mean), axis=-1, keepdims=True)
    return ((x - mean) * jax.lax.rsqrt(var + EPS)).astype(orig_dtype)


if __name__ == "__main__":
    key = jax.random.PRNGKey(0)

    # Case 1: small shape consistent with the module, bf16 round-trip.
    batch, seq, hidden = 2, 8, 32
    x = jax.random.normal(key, (batch, seq, hidden), dtype=jnp.float32)
    x = x.astype(jnp.bfloat16)

    out = jax.block_until_ready(olmo_layer_norm(x))
    ref = _reference_olmo_layer_norm(x)
    assert out.shape == x.shape
    assert out.dtype == x.dtype
    assert jnp.allclose(
        out.astype(jnp.float32), ref.astype(jnp.float32), atol=1e-2, rtol=1e-2
    ), "Pallas OlmoLayerNorm mismatch vs reference (bf16 case)"

    # Case 2: row count not a multiple of the tile (exercises the ragged last
    # block), lane-aligned hidden, fp32.
    x2 = jax.random.normal(jax.random.PRNGKey(1), (3, 5, 256), dtype=jnp.float32)
    out2 = jax.block_until_ready(olmo_layer_norm(x2))
    ref2 = _reference_olmo_layer_norm(x2)
    assert out2.shape == x2.shape and out2.dtype == x2.dtype
    assert jnp.allclose(out2, ref2, atol=1e-5, rtol=1e-5), (
        "Pallas OlmoLayerNorm mismatch vs reference (ragged-grid case)"
    )

    # Case 3: nonzero mean + multi-step grid; validates the fp32 single-pass
    # variance (E[x^2] - mean^2) against the two-pass reference.
    x3 = jax.random.normal(jax.random.PRNGKey(2), (4, 16, 128), dtype=jnp.float32) + 2.0
    out3 = jax.block_until_ready(olmo_layer_norm(x3))
    ref3 = _reference_olmo_layer_norm(x3)
    assert out3.shape == x3.shape and out3.dtype == x3.dtype
    assert jnp.allclose(out3, ref3, atol=1e-5, rtol=1e-5), (
        "Pallas OlmoLayerNorm mismatch vs reference (nonzero-mean / multi-step case)"
    )

    print("KERNEL_OK")
</pallas_src>

<mosaic_0001>
module attributes {stable_mosaic.version = 11 : i64} {
  func.func @_olmo_layernorm_kernel(%arg0: i32, %arg1: memref<16x32xbf16, #tpu.memory_space<vmem>>, %arg2: memref<16x32xbf16, #tpu.memory_space<vmem>>) attributes {dimension_semantics = [#tpu.dimension_semantics<parallel>], iteration_bounds = array<i64: 1>, scalar_prefetch = 0 : i64, scratch_operands = 0 : i64, tpu.core_type = #tpu.core_type<tc>, window_params = [{transform_indices = @transform_0, window_bounds = array<i64: 16, 32>}, {transform_indices = @transform_1, window_bounds = array<i64: 16, 32>}]} {
    %c0 = arith.constant 0 : index
    %c0_0 = arith.constant 0 : index
    %0 = vector.load %arg1[%c0, %c0_0] : memref<16x32xbf16, #tpu.memory_space<vmem>>, vector<16x32xbf16>
    %1 = arith.extf %0 : vector<16x32xbf16> to vector<16x32xf32>
    %cst = arith.constant dense<0.000000e+00> : vector<16xf32>
    %2 = vector.multi_reduction <add>, %1, %cst [1] : vector<16x32xf32> to vector<16xf32>
    %3 = vector.shape_cast %2 : vector<16xf32> to vector<16x1xf32>
    %cst_1 = arith.constant 3.125000e-02 : f32
    %4 = vector.broadcast %cst_1 : f32 to vector<16x1xf32>
    %5 = arith.mulf %3, %4 : vector<16x1xf32>
    %6 = arith.mulf %1, %1 : vector<16x32xf32>
    %cst_2 = arith.constant dense<0.000000e+00> : vector<16xf32>
    %7 = vector.multi_reduction <add>, %6, %cst_2 [1] : vector<16x32xf32> to vector<16xf32>
    %8 = vector.shape_cast %7 : vector<16xf32> to vector<16x1xf32>
    %cst_3 = arith.constant 3.125000e-02 : f32
    %9 = vector.broadcast %cst_3 : f32 to vector<16x1xf32>
    %10 = arith.mulf %8, %9 : vector<16x1xf32>
    %11 = arith.mulf %5, %5 : vector<16x1xf32>
    %12 = arith.subf %10, %11 : vector<16x1xf32>
    %cst_4 = arith.constant 0.000000e+00 : f32
    %13 = vector.broadcast %cst_4 : f32 to vector<16x1xf32>
    %14 = arith.maximumf %12, %13 : vector<16x1xf32>
    %cst_5 = arith.constant 9.99999974E-6 : f32
    %15 = vector.broadcast %cst_5 : f32 to vector<16x1xf32>
    %16 = arith.addf %14, %15 : vector<16x1xf32>
    %17 = math.rsqrt %16 : vector<16x1xf32>
    %18 = vector.broadcast %5 : vector<16x1xf32> to vector<16x32xf32>
    %19 = arith.subf %1, %18 : vector<16x32xf32>
    %20 = vector.broadcast %17 : vector<16x1xf32> to vector<16x32xf32>
    %21 = arith.mulf %19, %20 : vector<16x32xf32>
    %22 = arith.truncf %21 : vector<16x32xf32> to vector<16x32xbf16>
    %c0_6 = arith.constant 0 : index
    %c0_7 = arith.constant 0 : index
    %23 = vector.load %arg2[%c0_6, %c0_7] : memref<16x32xbf16, #tpu.memory_space<vmem>>, vector<16x32xbf16>
    tpu.vector_store %arg2[%c0_6, %c0_7], %22 {strides = array<i32>} : memref<16x32xbf16, #tpu.memory_space<vmem>>, vector<16x32xbf16>,
    return
  }
  func.func @transform_0(%arg0: i32) -> (i32, i32) {
    %c0_i32 = arith.constant 0 : i32
    %c0_i32_0 = arith.constant 0 : i32
    return %arg0, %c0_i32 : i32, i32
  }
  func.func @transform_1(%arg0: i32) -> (i32, i32) {
    %c0_i32 = arith.constant 0 : i32
    %c0_i32_0 = arith.constant 0 : i32
    return %arg0, %c0_i32 : i32, i32
  }
}

</mosaic_0001>

<llo_original>
// kernel: tpu_custom_call.1
$region0: #{tpu_custom_call.1}
  #allocation0 [shape = 'u32[]', space=smem, size = 0x4, offset = 0x4, fixed_abs, tag = 'smem constant byte address 0x4 - core index']
  #allocation1 [shape = 'u32[144,128]{1,0:T(1,128)}', space=vmem, size = 0x12000, scoped, tag = 'internal scratch']
  %s0 = inlined_call_operand.hbm [shape: bf16[16,32], index: 0, kind: input, shape index: {}]
  %s1 = inlined_call_operand.hbm [shape: bf16[16,32], index: 1, kind: output, shape index: {}]
  %s2 = sld [smem:[#allocation0]]
  $region18: #{tpu_custom_call.1} parent=0
    _
  %s4 = ssub.s32 1, %s2
  %s5 = scalar_select 0, %s4, %s2
  $region1: #{tpu_custom_call.1} parent=0
    #allocation2 [shape = 'u8[4096]{0}', space=vmem, size = 0x1000, scoped, tag = 'input window, operand 0, single buffered']
    #allocation3 [shape = 's32[1]{0}', space=sflag, size = 0x4, scoped, tag = 'scoped memory for tpu_custom_call.1']
    #allocation4 [shape = 's32[1]{0}', space=sflag, size = 0x4, scoped, tag = 'scoped memory for tpu_custom_call.1']
    #allocation5 [shape = 'u8[4096]{0}', space=vmem, size = 0x1000, scoped, tag = 'output window, operand 0, single buffered']
    %6 = vsyncpa [#allocation3], 0
    %7 = vsyncpa [#allocation4], 0
    // Predicated region
    $region2: #{tpu_custom_call.1} parent=1 // pred_check
      _
    $region3: #{tpu_custom_call.1} parent=1 // pred_check_branch
      %9 = sbr.rel (0) target = $region5
    $region4: #{tpu_custom_call.1} parent=1 // pred_region
      %s11 = ssub.s32 128, 128
      %12 = vsyncadd [#allocation3], %s11
      %s13 = sshll.u32 [#allocation2], 4
      %s14 = int_to_ptr.vmem [resolvable:$true] %s13
      %19 = dma.hbm_to_vmem [thread:$0]  %s0, 128, %s14, [#allocation3], 64, 64, 4
    $region5: #{tpu_custom_call.1} parent=1 // pred_fallthru
      _
    // Predicated region
    $region6: #{tpu_custom_call.1} parent=1 // pred_check
      _
    $region7: #{tpu_custom_call.1} parent=1 // pred_check_branch
      %21 = sbr.rel (0) target = $region9
    $region8: #{tpu_custom_call.1} parent=1 // pred_region
      %22 = dma.done [#allocation3], 128
    $region9: #{tpu_custom_call.1} parent=1 // pred_fallthru
      _
    %v23 = vld [vmem:[#allocation2] sm:$0xf]
    %v24 = vld [vmem:[#allocation2 + $0x4] sm:$0xf]
    %v25 = vunpack.c.l.bf16 %v23
    %v26 = vunpack.c.l.bf16 %v24
    %vm27 = vcmask 261120
    %v28 = vsel %vm27, %v25, 0.0
    %29 = vadd.xlane.f32.xlu0 %v28
    %v30 = vpop.xlane.xlu0 %29
    %v31 = vsel %vm27, %v26, 0.0
    %32 = vadd.xlane.f32.xlu0 %v31
    %v33 = vpop.xlane.xlu0 %32
    %v34 = vmul.f32 %v30, 0.03125
    %v35 = vmul.f32 %v33, 0.03125
    %v36 = vmul.f32 %v25, %v25
    %v37 = vmul.f32 %v26, %v26
    %v38 = vsel %vm27, %v36, 0.0
    %39 = vadd.xlane.f32.xlu0 %v38
    %v40 = vpop.xlane.xlu0 %39
    %v41 = vsel %vm27, %v37, 0.0
    %42 = vadd.xlane.f32.xlu0 %v41
    %v43 = vpop.xlane.xlu0 %42
    %v44 = vmul.f32 %v40, 0.03125
    %v45 = vmul.f32 %v43, 0.03125
    %v46 = vmul.f32 %v34, %v34
    %v47 = vmul.f32 %v35, %v35
    %v48 = vsub.f32 %v44, %v46
    %v49 = vsub.f32 %v45, %v47
    %v50 = vmax.f32 %v48, 0.0
    %v51 = vmax.f32 %v49, 0.0
    %v52 = vadd.f32 %v50, 1e-05
    %v53 = vadd.f32 %v51, 1e-05
    %v54 = vrsqrt.pop %v52
    %v55 = vrsqrt.pop %v53
    %v56 = vsub.f32 %v25, %v34
    %v57 = vsub.f32 %v26, %v35
    %v58 = vmul.f32 %v56, %v54
    %v59 = vmul.f32 %v57, %v55
    %v60 = vpack.c.bf16 %v59, %v58
    %v62 = vunpack.c.l.b16 %v60
    %v63 = vunpack.c.h.b16 %v60
    %v64 = vpack.c.b16 %v62, %v62
    %v65 = vpack.c.b16 %v63, %v63
    %vm68 = vcmask 257024
    %69 = vst.msk [vmem:[#allocation5] sm:$0xf] %vm68, %v64
    %70 = vst.msk [vmem:[#allocation5 + $0x4] sm:$0xf] %vm68, %v65
    // Predicated region
    $region10: #{tpu_custom_call.1} parent=1 // pred_check
      _
    $region11: #{tpu_custom_call.1} parent=1 // pred_check_branch
      %72 = sbr.rel (0) target = $region13
    $region12: #{tpu_custom_call.1} parent=1 // pred_region
      %s74 = ssub.s32 128, 128
      %75 = vsyncadd [#allocation4], %s74
      %s76 = sshll.u32 [#allocation5], 4
      %s77 = int_to_ptr.vmem [resolvable:$true] %s76
      %82 = dma.vmem_to_hbm [thread:$0]  %s77, 128, %s1, [#allocation4], 64, 64, 4
    $region13: #{tpu_custom_call.1} parent=1 // pred_fallthru
      _
    // Predicated region
    $region14: #{tpu_custom_call.1} parent=1 // pred_check
      _
    $region15: #{tpu_custom_call.1} parent=1 // pred_check_branch
      %84 = sbr.rel (0) target = $region17
    $region16: #{tpu_custom_call.1} parent=1 // pred_region
      %85 = dma.done [#allocation4], 128
    $region17: #{tpu_custom_call.1} parent=1 // pred_fallthru
      _
    %86 = vsyncpa [#allocation3], 1
    %87 = vsyncpa [#allocation4], 1

</llo_original>
